<compile_context>
chip_gen: v7x
topology: tpu7x:2x2x1
jax: 0.10.0
libtpu: 0.0.40
codegen_flags: <defaults>
</compile_context>

<pallas_src>
import functools

import jax
import jax.numpy as jnp
from jax.experimental import pallas as pl
from jax.experimental.pallas import tpu as pltpu


# --------------------- shared per-token fake-quant math --------------------- #
# TODO(synk): exact Quantizer class source not provided; this implements the
# standard dynamic per-token symmetric fake quant (scale = amax/qmax, round,
# clip, dequant) matching bits=8, sym=True, dynamic_method='pertoken'.
def _fake_quant_rows(x_f32, qmax):
    """Per-row symmetric fake quant of an f32 2-D tile (rows = tokens)."""
    amax = jnp.max(jnp.abs(x_f32), axis=-1, keepdims=True)
    scale = jnp.maximum(amax, 1e-8) * (1.0 / qmax)
    inv_scale = pl.reciprocal(scale, approx=True)  # EUP slot, ~free vs VALU div
    q = jnp.clip(jnp.round(x_f32 * inv_scale), -qmax, qmax)
    return q * scale


# ----------------------- batched matmul (plain layout) ---------------------- #
def _bmm_kernel(x1_ref, x2_ref, o_ref, *, heads):
    # x1_ref: (1, H, M, K), x2_ref: (1, H, K, N), o_ref: (1, H, M, N)
    # Static unroll over heads: each head's matmul hits the MXU; grid overhead
    # is amortized over all H heads of one batch element.
    for h in range(heads):
        acc = jnp.dot(x1_ref[0, h], x2_ref[0, h],
                      preferred_element_type=jnp.float32)
        o_ref[0, h] = acc.astype(o_ref.dtype)


def batched_matmul(x1, x2, *, is_qkmat=False):
    """x1: (B, H, M, K), x2: (B, H, K, N) -> (B, H, M, N)."""
    B, H, M, K = x1.shape
    B2, H2, K2, N = x2.shape
    assert (B, H, K) == (B2, H2, K2), "shape mismatch"

    # is_qkmat: torch does x1.float() @ x2.float(); we keep native operands and
    # accumulate in f32 on the MXU (equivalent at input precision), output f32.
    out_dtype = jnp.float32 if is_qkmat else jnp.result_type(x1.dtype, x2.dtype)

    return pl.pallas_call(
        functools.partial(_bmm_kernel, heads=H),
        out_shape=jax.ShapeDtypeStruct((B, H, M, N), out_dtype),
        grid_spec=pltpu.PrefetchScalarGridSpec(
            num_scalar_prefetch=0,
            grid=(B,),
            in_specs=[
                pl.BlockSpec((1, H, M, K), lambda b: (b, 0, 0, 0)),
                pl.BlockSpec((1, H, K, N), lambda b: (b, 0, 0, 0)),
            ],
            out_specs=pl.BlockSpec((1, H, M, N), lambda b: (b, 0, 0, 0)),
        ),
        compiler_params=pltpu.CompilerParams(
            dimension_semantics=("parallel",)),
    )(x1, x2)


# ------------- P@V matmul with fused transpose/reshape (+ quant) ------------ #
def _pvmat_kernel(x1_ref, x2_ref, o_ref, *, heads, fuse_quant, qmax):
    # x1_ref: (1, H, M, K), x2_ref: (1, H, K, N), o_ref: (1, M, H*N)
    parts = []
    for h in range(heads):
        parts.append(jnp.dot(x1_ref[0, h], x2_ref[0, h],
                             preferred_element_type=jnp.float32))
    # Lane-dense (M, H*N) slab == transpose(1,2)+reshape of the (H, M, N) result.
    out = jnp.concatenate(parts, axis=-1)
    if fuse_quant:
        # Per-token amax over the full H*N feature axis (matches torch's
        # reshape-then-quantize order).
        out = _fake_quant_rows(out, qmax)
    o_ref[0] = out.astype(o_ref.dtype)


def pvmat_matmul(x1, x2, *, is_qkmat=False, use_act_quant=False, bits=8):
    """x1: (B, H, M, K), x2: (B, H, K, N) -> (B, M, H*N), optional fused quant."""
    B, H, M, K = x1.shape
    B2, H2, K2, N = x2.shape
    assert (B, H, K) == (B2, H2, K2), "shape mismatch"

    out_dtype = jnp.float32 if is_qkmat else jnp.result_type(x1.dtype, x2.dtype)
    qmax = float(2 ** (bits - 1) - 1)

    return pl.pallas_call(
        functools.partial(_pvmat_kernel, heads=H,
                          fuse_quant=use_act_quant, qmax=qmax),
        out_shape=jax.ShapeDtypeStruct((B, M, H * N), out_dtype),
        grid_spec=pltpu.PrefetchScalarGridSpec(
            num_scalar_prefetch=0,
            grid=(B,),
            in_specs=[
                pl.BlockSpec((1, H, M, K), lambda b: (b, 0, 0, 0)),
                pl.BlockSpec((1, H, K, N), lambda b: (b, 0, 0, 0)),
            ],
            out_specs=pl.BlockSpec((1, M, H * N), lambda b: (b, 0, 0)),
        ),
        compiler_params=pltpu.CompilerParams(
            dimension_semantics=("parallel",)),
    )(x1, x2)


# ---------------- standalone per-token fake quant (tiled pass) --------------- #
def _fakequant_kernel(x_ref, o_ref, *, qmax):
    x = x_ref[...].astype(jnp.float32)
    o_ref[...] = _fake_quant_rows(x, qmax).astype(o_ref.dtype)


def fake_quant_pertoken(x, *, bits=8, row_tile=512):
    orig_shape = x.shape
    feat = orig_shape[-1]
    tokens = 1
    for d in orig_shape[:-1]:
        tokens *= d
    x2d = x.reshape(tokens, feat)
    qmax = float(2 ** (bits - 1) - 1)

    # Row-tiled, pipelined pass (each row's quant is independent, so padded
    # rows of a partial last tile are harmless / masked on store).
    T = tokens if tokens <= row_tile else row_tile  # row_tile is a multiple of 8
    grid = (pl.cdiv(tokens, T),)

    out = pl.pallas_call(
        functools.partial(_fakequant_kernel, qmax=qmax),
        out_shape=jax.ShapeDtypeStruct((tokens, feat), x.dtype),
        grid_spec=pltpu.PrefetchScalarGridSpec(
            num_scalar_prefetch=0,
            grid=grid,
            in_specs=[pl.BlockSpec((T, feat), lambda i: (i, 0))],
            out_specs=pl.BlockSpec((T, feat), lambda i: (i, 0)),
        ),
        compiler_params=pltpu.CompilerParams(
            dimension_semantics=("parallel",)),
    )(x2d)
    return out.reshape(orig_shape)


# ------------------------------ module wrapper ------------------------------ #
class QuantMatmulPallas:
    """JAX/Pallas equivalent of the PyTorch QuantMatmul module."""

    def __init__(self, is_pvmat=False, is_qkmat=False, use_act_quant=False,
                 bits=8):
        self.is_pvmat = is_pvmat
        self.is_qkmat = is_qkmat
        self.use_act_quant = use_act_quant  # defaults to False, as in torch
        self.bits = bits

    def __call__(self, x1, x2):
        if self.is_pvmat:
            # matmul + transpose/reshape (+ optional fake quant) fused in-kernel
            return pvmat_matmul(x1, x2, is_qkmat=self.is_qkmat,
                                use_act_quant=self.use_act_quant,
                                bits=self.bits)
        out = batched_matmul(x1, x2, is_qkmat=self.is_qkmat)
        if self.use_act_quant:
            out = fake_quant_pertoken(out, bits=self.bits)
        return out


# ----------------------------------- main ----------------------------------- #
if __name__ == "__main__":
    key = jax.random.PRNGKey(0)
    k1, k2, k3, k4 = jax.random.split(key, 4)

    B, H, L, D = 2, 4, 8, 32  # batch, heads, seq, head_dim

    # --- QK^T style matmul (is_qkmat=True): out (B, H, L, L), fp32 ---
    q = jax.random.normal(k1, (B, H, L, D), dtype=jnp.float32)
    kt = jax.random.normal(k2, (B, H, D, L), dtype=jnp.float32)
    qk_mod = QuantMatmulPallas(is_qkmat=True)
    scores = jax.block_until_ready(qk_mod(q, kt))
    ref_scores = jnp.matmul(q.astype(jnp.float32), kt.astype(jnp.float32))
    assert scores.shape == (B, H, L, L)
    assert scores.dtype == jnp.float32
    assert jnp.allclose(scores, ref_scores, atol=1e-4, rtol=1e-4)

    # --- P @ V style matmul (is_pvmat=True): out written as (B, L, H*D) ---
    p = jax.random.normal(k3, (B, H, L, L), dtype=jnp.float32)
    v = jax.random.normal(k4, (B, H, L, D), dtype=jnp.float32)
    pv_mod = QuantMatmulPallas(is_pvmat=True)
    ctx = jax.block_until_ready(pv_mod(p, v))
    ref_ctx = jnp.matmul(p, v)
    ref_ctx = jnp.transpose(ref_ctx, (0, 2, 1, 3)).reshape(B, L, H * D)
    assert ctx.shape == (B, L, H * D)
    assert jnp.allclose(ctx, ref_ctx, atol=1e-4, rtol=1e-4)

    # --- fused pvmat + activation fake-quant path (use_act_quant=True) ---
    pv_q_mod = QuantMatmulPallas(is_pvmat=True, use_act_quant=True)
    ctx_q = jax.block_until_ready(pv_q_mod(p, v))
    assert ctx_q.shape == (B, L, H * D)
    assert bool(jnp.all(jnp.isfinite(ctx_q)))
    # fake quant error should be within ~2 LSB of the per-token scale
    row_amax = jnp.max(jnp.abs(ref_ctx), axis=-1, keepdims=True)
    assert bool(jnp.all(jnp.abs(ctx_q - ref_ctx) <= 2.0 * row_amax / 127.0 + 1e-6))

    # --- standalone tiled fake-quant path (non-pvmat + use_act_quant) ---
    qk_q_mod = QuantMatmulPallas(is_qkmat=True, use_act_quant=True)
    scores_q = jax.block_until_ready(qk_q_mod(q, kt))
    assert scores_q.shape == (B, H, L, L)
    row_amax_s = jnp.max(jnp.abs(ref_scores), axis=-1, keepdims=True)
    assert bool(jnp.all(jnp.abs(scores_q - ref_scores)
                        <= 2.0 * row_amax_s / 127.0 + 1e-6))

    print("KERNEL_OK")
</pallas_src>

<mosaic_0001>
module attributes {stable_mosaic.version = 11 : i64} {
  func.func @_bmm_kernel(%arg0: i32, %arg1: memref<1x4x8x32xf32, #tpu.memory_space<vmem>>, %arg2: memref<1x4x32x8xf32, #tpu.memory_space<vmem>>, %arg3: memref<1x4x8x8xf32, #tpu.memory_space<vmem>>) attributes {dimension_semantics = [#tpu.dimension_semantics<parallel>], iteration_bounds = array<i64: 2>, scalar_prefetch = 0 : i64, scratch_operands = 0 : i64, tpu.core_type = #tpu.core_type<tc>, window_params = [{transform_indices = @transform_0, window_bounds = array<i64: 1, 4, 8, 32>}, {transform_indices = @transform_1, window_bounds = array<i64: 1, 4, 32, 8>}, {transform_indices = @transform_2, window_bounds = array<i64: 1, 4, 8, 8>}]} {
    %c0 = arith.constant 0 : index
    %c0_0 = arith.constant 0 : index
    %c0_1 = arith.constant 0 : index
    %c0_2 = arith.constant 0 : index
    %0 = vector.load %arg1[%c0, %c0_0, %c0_1, %c0_2] : memref<1x4x8x32xf32, #tpu.memory_space<vmem>>, vector<1x1x8x32xf32>
    %1 = vector.shape_cast %0 : vector<1x1x8x32xf32> to vector<8x32xf32>
    %c0_3 = arith.constant 0 : index
    %c0_4 = arith.constant 0 : index
    %c0_5 = arith.constant 0 : index
    %c0_6 = arith.constant 0 : index
    %2 = vector.load %arg2[%c0_3, %c0_4, %c0_5, %c0_6] : memref<1x4x32x8xf32, #tpu.memory_space<vmem>>, vector<1x1x32x8xf32>
    %3 = vector.shape_cast %2 : vector<1x1x32x8xf32> to vector<32x8xf32>
    %cst = arith.constant dense<0.000000e+00> : vector<8x8xf32>
    %4 = tpu.matmul %1, %3, %cst {dimension_numbers = #tpu.dot_dimension_numbers<[1], [0], [0], [1], [0, 0, 1, 1], [], []>} : vector<8x32xf32>, vector<32x8xf32>, vector<8x8xf32> -> vector<8x8xf32>
    %c0_7 = arith.constant 0 : index
    %c0_8 = arith.constant 0 : index
    %c0_9 = arith.constant 0 : index
    %c0_10 = arith.constant 0 : index
    %5 = vector.load %arg3[%c0_7, %c0_8, %c0_9, %c0_10] : memref<1x4x8x8xf32, #tpu.memory_space<vmem>>, vector<1x1x8x8xf32>
    %6 = vector.shape_cast %5 : vector<1x1x8x8xf32> to vector<8x8xf32>
    %7 = vector.shape_cast %4 : vector<8x8xf32> to vector<1x1x8x8xf32>
    tpu.vector_store %arg3[%c0_7, %c0_8, %c0_9, %c0_10], %7 {strides = array<i32>} : memref<1x4x8x8xf32, #tpu.memory_space<vmem>>, vector<1x1x8x8xf32>,
    %c0_11 = arith.constant 0 : index
    %c1 = arith.constant 1 : index
    %c0_12 = arith.constant 0 : index
    %c0_13 = arith.constant 0 : index
    %8 = vector.load %arg1[%c0_11, %c1, %c0_12, %c0_13] : memref<1x4x8x32xf32, #tpu.memory_space<vmem>>, vector<1x1x8x32xf32>
    %9 = vector.shape_cast %8 : vector<1x1x8x32xf32> to vector<8x32xf32>
    %c0_14 = arith.constant 0 : index
    %c1_15 = arith.constant 1 : index
    %c0_16 = arith.constant 0 : index
    %c0_17 = arith.constant 0 : index
    %10 = vector.load %arg2[%c0_14, %c1_15, %c0_16, %c0_17] : memref<1x4x32x8xf32, #tpu.memory_space<vmem>>, vector<1x1x32x8xf32>
    %11 = vector.shape_cast %10 : vector<1x1x32x8xf32> to vector<32x8xf32>
    %cst_18 = arith.constant dense<0.000000e+00> : vector<8x8xf32>
    %12 = tpu.matmul %9, %11, %cst_18 {dimension_numbers = #tpu.dot_dimension_numbers<[1], [0], [0], [1], [0, 0, 1, 1], [], []>} : vector<8x32xf32>, vector<32x8xf32>, vector<8x8xf32> -> vector<8x8xf32>
    %c0_19 = arith.constant 0 : index
    %c1_20 = arith.constant 1 : index
    %c0_21 = arith.constant 0 : index
    %c0_22 = arith.constant 0 : index
    %13 = vector.load %arg3[%c0_19, %c1_20, %c0_21, %c0_22] : memref<1x4x8x8xf32, #tpu.memory_space<vmem>>, vector<1x1x8x8xf32>
    %14 = vector.shape_cast %13 : vector<1x1x8x8xf32> to vector<8x8xf32>
    %15 = vector.shape_cast %12 : vector<8x8xf32> to vector<1x1x8x8xf32>
    tpu.vector_store %arg3[%c0_19, %c1_20, %c0_21, %c0_22], %15 {strides = array<i32>} : memref<1x4x8x8xf32, #tpu.memory_space<vmem>>, vector<1x1x8x8xf32>,
    %c0_23 = arith.constant 0 : index
    %c2 = arith.constant 2 : index
    %c0_24 = arith.constant 0 : index
    %c0_25 = arith.constant 0 : index
    %16 = vector.load %arg1[%c0_23, %c2, %c0_24, %c0_25] : memref<1x4x8x32xf32, #tpu.memory_space<vmem>>, vector<1x1x8x32xf32>
    %17 = vector.shape_cast %16 : vector<1x1x8x32xf32> to vector<8x32xf32>
    %c0_26 = arith.constant 0 : index
    %c2_27 = arith.constant 2 : index
    %c0_28 = arith.constant 0 : index
    %c0_29 = arith.constant 0 : index
    %18 = vector.load %arg2[%c0_26, %c2_27, %c0_28, %c0_29] : memref<1x4x32x8xf32, #tpu.memory_space<vmem>>, vector<1x1x32x8xf32>
    %19 = vector.shape_cast %18 : vector<1x1x32x8xf32> to vector<32x8xf32>
    %cst_30 = arith.constant dense<0.000000e+00> : vector<8x8xf32>
    %20 = tpu.matmul %17, %19, %cst_30 {dimension_numbers = #tpu.dot_dimension_numbers<[1], [0], [0], [1], [0, 0, 1, 1], [], []>} : vector<8x32xf32>, vector<32x8xf32>, vector<8x8xf32> -> vector<8x8xf32>
    %c0_31 = arith.constant 0 : index
    %c2_32 = arith.constant 2 : index
    %c0_33 = arith.constant 0 : index
    %c0_34 = arith.constant 0 : index
    %21 = vector.load %arg3[%c0_31, %c2_32, %c0_33, %c0_34] : memref<1x4x8x8xf32, #tpu.memory_space<vmem>>, vector<1x1x8x8xf32>
    %22 = vector.shape_cast %21 : vector<1x1x8x8xf32> to vector<8x8xf32>
    %23 = vector.shape_cast %20 : vector<8x8xf32> to vector<1x1x8x8xf32>
    tpu.vector_store %arg3[%c0_31, %c2_32, %c0_33, %c0_34], %23 {strides = array<i32>} : memref<1x4x8x8xf32, #tpu.memory_space<vmem>>, vector<1x1x8x8xf32>,
    %c0_35 = arith.constant 0 : index
    %c3 = arith.constant 3 : index
    %c0_36 = arith.constant 0 : index
    %c0_37 = arith.constant 0 : index
    %24 = vector.load %arg1[%c0_35, %c3, %c0_36, %c0_37] : memref<1x4x8x32xf32, #tpu.memory_space<vmem>>, vector<1x1x8x32xf32>
    %25 = vector.shape_cast %24 : vector<1x1x8x32xf32> to vector<8x32xf32>
    %c0_38 = arith.constant 0 : index
    %c3_39 = arith.constant 3 : index
    %c0_40 = arith.constant 0 : index
    %c0_41 = arith.constant 0 : index
    %26 = vector.load %arg2[%c0_38, %c3_39, %c0_40, %c0_41] : memref<1x4x32x8xf32, #tpu.memory_space<vmem>>, vector<1x1x32x8xf32>
    %27 = vector.shape_cast %26 : vector<1x1x32x8xf32> to vector<32x8xf32>
    %cst_42 = arith.constant dense<0.000000e+00> : vector<8x8xf32>
    %28 = tpu.matmul %25, %27, %cst_42 {dimension_numbers = #tpu.dot_dimension_numbers<[1], [0], [0], [1], [0, 0, 1, 1], [], []>} : vector<8x32xf32>, vector<32x8xf32>, vector<8x8xf32> -> vector<8x8xf32>
    %c0_43 = arith.constant 0 : index
    %c3_44 = arith.constant 3 : index
    %c0_45 = arith.constant 0 : index
    %c0_46 = arith.constant 0 : index
    %29 = vector.load %arg3[%c0_43, %c3_44, %c0_45, %c0_46] : memref<1x4x8x8xf32, #tpu.memory_space<vmem>>, vector<1x1x8x8xf32>
    %30 = vector.shape_cast %29 : vector<1x1x8x8xf32> to vector<8x8xf32>
    %31 = vector.shape_cast %28 : vector<8x8xf32> to vector<1x1x8x8xf32>
    tpu.vector_store %arg3[%c0_43, %c3_44, %c0_45, %c0_46], %31 {strides = array<i32>} : memref<1x4x8x8xf32, #tpu.memory_space<vmem>>, vector<1x1x8x8xf32>,
    return
  }
  func.func @transform_0(%arg0: i32) -> (i32, i32, i32, i32) {
    %c0_i32 = arith.constant 0 : i32
    %c0_i32_0 = arith.constant 0 : i32
    %c0_i32_1 = arith.constant 0 : i32
    %c0_i32_2 = arith.constant 0 : i32
    return %arg0, %c0_i32, %c0_i32_0, %c0_i32_1 : i32, i32, i32, i32
  }
  func.func @transform_1(%arg0: i32) -> (i32, i32, i32, i32) {
    %c0_i32 = arith.constant 0 : i32
    %c0_i32_0 = arith.constant 0 : i32
    %c0_i32_1 = arith.constant 0 : i32
    %c0_i32_2 = arith.constant 0 : i32
    return %arg0, %c0_i32, %c0_i32_0, %c0_i32_1 : i32, i32, i32, i32
  }
  func.func @transform_2(%arg0: i32) -> (i32, i32, i32, i32) {
    %c0_i32 = arith.constant 0 : i32
    %c0_i32_0 = arith.constant 0 : i32
    %c0_i32_1 = arith.constant 0 : i32
    %c0_i32_2 = arith.constant 0 : i32
    return %arg0, %c0_i32, %c0_i32_0, %c0_i32_1 : i32, i32, i32, i32
  }
}

</mosaic_0001>

<llo_original>
// kernel: tpu_custom_call.1
$region0: #{tpu_custom_call.1}
  #allocation0 [shape = 'u32[]', space=smem, size = 0x4, offset = 0x4, fixed_abs, tag = 'smem constant byte address 0x4 - core index']
  #allocation1 [shape = 'u32[144,128]{1,0:T(1,128)}', space=vmem, size = 0x12000, scoped, tag = 'internal scratch']
  %s0 = inlined_call_operand.vmem [shape: f32[2,4,8,32], index: 0, kind: input, shape index: {}]
  %s1 = inlined_call_operand.vmem [shape: f32[2,4,32,8], index: 1, kind: input, shape index: {}]
  %s2 = inlined_call_operand.hbm [shape: f32[2,4,8,8], index: 2, kind: output, shape index: {}]
  %s3 = sld [smem:[#allocation0]]
  $region41: #{tpu_custom_call.1} parent=0
    _
  %s5 = ssub.s32 1, %s3
  %s6 = scalar_select 0, %s5, %s3
  $region1: #{tpu_custom_call.1} parent=0
    #allocation2 [shape = 'u8[32768]{0}', space=vmem, size = 0x8000, scoped, tag = 'output window, operand 0']
    #allocation3 [shape = 's32[2]{0}', space=sflag, size = 0x8, scoped, tag = 'scoped memory for tpu_custom_call.1']
    %7 = vsyncpa [#allocation3], 0
    %s8 = scalar_lea.sflag [#allocation3], 1
    %9 = vsyncpa %s8, 0
    loop: start=0, step=1, limit=4
    $region2: #{tpu_custom_call.1} parent=1 // loop_pre_header
      _
    $region3: #{tpu_custom_call.1} parent=1 // loop_header
      %s11 = sphi 0, %s15
      %p12 = scmp.ge.s32.totalorder %s11, 4
      %s21 = sphi 0, %s23
      %s24 = sphi 0, %s21
      %s25 = sphi 0, %s24
      %s41 = sphi 0, %s25
      %s47 = sphi 0, %s49
      %s50 = sphi 0, %s47
      %s51 = sphi 0, %s50
      %s67 = sphi 0, %s51
      %s73 = sphi 0, %s75
      %s76 = sphi 0, %s73
      %s77 = sphi 0, %s76
      %s93 = sphi 0, %s77
    $region4: #{tpu_custom_call.1} parent=1 // loop_header_branch
      %14 = sbr.rel (%p12) target = $region8
    $region5: #{tpu_custom_call.1} parent=1 // loop_body
      %s16 = ssub.s32 %s11, 1
      %s17 = ssub.s32 %s11, 2
      %s18 = sadd.s32 %s11, 1
      %s19 = ssub.s32 %s11, %s18
      %p20 = scmp.eq.s32.totalorder %s19, 0
      %s22 = sadd.s32 %s21, 1
      %s23 = scalar_select %p20, %s21, %s22
      %p26 = pneg %p20
      %p27 = scmp.eq.s32.totalorder %s11, 1
      %p28 = por %p26, %p27
      %p29 = scmp.ne.s32.totalorder %s21, %s24
      %p30 = scmp.eq.s32.totalorder %s11, 0
      %p31 = por %p29, %p30
      %p32 = scmp.ne.s32.totalorder %s21, %s24
      %p33 = scmp.eq.s32.totalorder %s16, 1
      %p34 = por %p32, %p33
      %p35 = scmp.ne.s32.totalorder %s24, %s25
      %p36 = scmp.eq.s32.totalorder %s16, 0
      %p37 = por %p35, %p36
      %p38 = scmp.ne.s32.totalorder %s24, %s25
      %p39 = scmp.eq.s32.totalorder %s17, 1
      %p40 = por %p38, %p39
      %p42 = scmp.ne.s32.totalorder %s25, %s41
      %p43 = scmp.eq.s32.totalorder %s17, 0
      %p44 = por %p42, %p43
      %s45 = ssub.s32 %s11, %s18
      %p46 = scmp.eq.s32.totalorder %s45, 0
      %s48 = sadd.s32 %s47, 1
      %s49 = scalar_select %p46, %s47, %s48
      %p52 = pneg %p46
      %p53 = scmp.eq.s32.totalorder %s11, 1
      %p54 = por %p52, %p53
      %p55 = scmp.ne.s32.totalorder %s47, %s50
      %p56 = scmp.eq.s32.totalorder %s11, 0
      %p57 = por %p55, %p56
      %p58 = scmp.ne.s32.totalorder %s47, %s50
      %p59 = scmp.eq.s32.totalorder %s16, 1
      %p60 = por %p58, %p59
      %p61 = scmp.ne.s32.totalorder %s50, %s51
      %p62 = scmp.eq.s32.totalorder %s16, 0
      %p63 = por %p61, %p62
      %p64 = scmp.ne.s32.totalorder %s50, %s51
      %p65 = scmp.eq.s32.totalorder %s17, 1
      %p66 = por %p64, %p65
      %p68 = scmp.ne.s32.totalorder %s51, %s67
      %p69 = scmp.eq.s32.totalorder %s17, 0
      %p70 = por %p68, %p69
      %s71 = ssub.s32 %s11, %s18
      %p72 = scmp.eq.s32.totalorder %s71, 0
      %s74 = sadd.s32 %s73, 1
      %s75 = scalar_select %p72, %s73, %s74
      %p78 = pneg %p72
      %p79 = scmp.eq.s32.totalorder %s11, 1
      %p80 = por %p78, %p79
      %p81 = scmp.ne.s32.totalorder %s73, %s76
      %p82 = scmp.eq.s32.totalorder %s11, 0
      %p83 = por %p81, %p82
      %p84 = scmp.ne.s32.totalorder %s73, %s76
      %p85 = scmp.eq.s32.totalorder %s16, 1
      %p86 = por %p84, %p85
      %p87 = scmp.ne.s32.totalorder %s76, %s77
      %p88 = scmp.eq.s32.totalorder %s16, 0
      %p89 = por %p87, %p88
      %p90 = scmp.ne.s32.totalorder %s76, %s77
      %p91 = scmp.eq.s32.totalorder %s17, 1
      %p92 = por %p90, %p91
      %p94 = scmp.ne.s32.totalorder %s77, %s93
      %p95 = scmp.eq.s32.totalorder %s17, 0
      %p96 = por %p94, %p95
      %p97 = scmp.le.s32.totalorder 1, %s11
      %p98 = scmp.lt.s32.totalorder %s11, 3
      %p99 = pnand %p97, %p98
      %p100 = pneg %p99
      // Predicated region
      $region9: #{tpu_custom_call.1} parent=5 // pred_check
        _
      $region10: #{tpu_custom_call.1} parent=5 // pred_check_branch
        %102 = sbr.rel (%p99) target = $region12
      $region11: #{tpu_custom_call.1} parent=5 // pred_region
        %s103 = ssub.s32 %s11, 1
      $region12: #{tpu_custom_call.1} parent=5 // pred_fallthru
        _
      %p104 = scmp.lt.s32.totalorder %s11, 2
      // Predicated region
      $region13: #{tpu_custom_call.1} parent=5 // pred_check
        %p105 = pneg %p104
      $region14: #{tpu_custom_call.1} parent=5 // pred_check_branch
        %107 = sbr.rel (%p105) target = $region16
      $region15: #{tpu_custom_call.1} parent=5 // pred_region
        // Predicated region
        $region17: #{tpu_custom_call.1} parent=15 // pred_check
          %p108 = pneg %p31
        $region18: #{tpu_custom_call.1} parent=15 // pred_check_branch
          %110 = sbr.rel (%p108) target = $region20
        $region19: #{tpu_custom_call.1} parent=15 // pred_region
          %p111 = scmp.lt.s32.totalorder %s11, 1
          %s112 = scalar_select %p111, %s11, 1
          %s113 = smul.addr %s112, 4
          %s114 = smul.addr %s113, 8
          %s115 = scalar_lea.vmem %s0, %s114
        $region20: #{tpu_custom_call.1} parent=15 // pred_fallthru
          _
        // Predicated region
        $region21: #{tpu_custom_call.1} parent=15 // pred_check
          %p116 = pneg %p57
        $region22: #{tpu_custom_call.1} parent=15 // pred_check_branch
          %118 = sbr.rel (%p116) target = $region24
        $region23: #{tpu_custom_call.1} parent=15 // pred_region
          %p119 = scmp.lt.s32.totalorder %s11, 1
          %s120 = scalar_select %p119, %s11, 1
          %s121 = smul.addr %s120, 16
          %s122 = smul.addr %s121, 8
          %s123 = scalar_lea.vmem %s1, %s122
        $region24: #{tpu_custom_call.1} parent=15 // pred_fallthru
          _
      $region16: #{tpu_custom_call.1} parent=5 // pred_fallthru
        _
      %p124 = scmp.le.s32.totalorder 1, %s11
      %p125 = scmp.lt.s32.totalorder %s11, 3
      %p126 = pnand %p124, %p125
      %p127 = pneg %p126
      // Predicated region
      $region25: #{tpu_custom_call.1} parent=5 // pred_check
        _
      $region26: #{tpu_custom_call.1} parent=5 // pred_check_branch
        %129 = sbr.rel (%p126) target = $region28
      $region27: #{tpu_custom_call.1} parent=5 // pred_region
        %s130 = ssub.s32 %s11, 1
        %p131 = scmp.lt.s32.totalorder %s16, 1
        %s132 = scalar_select %p131, %s16, 1
        %s133 = smul.addr %s132, 4
        %s134 = smul.addr %s133, 8
        %s135 = scalar_lea.vmem %s0, %s134
        %p136 = pneg %p37
        %p137 = pneg %p34
        %p138 = scmp.lt.s32.totalorder %s16, 1
        %s139 = scalar_select %p138, %s16, 1
        %s140 = smul.addr %s139, 16
        %s141 = smul.addr %s140, 8
        %s142 = scalar_lea.vmem %s1, %s141
        %p143 = pneg %p63
        %p144 = pneg %p60
        %p145 = pneg %p89
        %p146 = pneg %p86
        %s147 = sand.u32 %s76, 1
        %s148 = scalar_lea.sflag [#allocation3], %s147
        %s149 = sand.u32 %s76, 1
        %s150 = smul.addr %s149, 32
        %s151 = scalar_lea.vmem [#allocation2], %s150
        %p152 = scmp.lt.s32.totalorder %s16, 1
        %s153 = scalar_select %p152, %s16, 1
        %s154 = smul.addr %s153, 4
        %s155 = smul.addr %s154, 8
        %s156 = scalar_lea.vmem %s0, %s155
        %p157 = scmp.lt.s32.totalorder %s16, 1
        %s158 = scalar_select %p157, %s16, 1
        %s159 = smul.addr %s158, 16
        %s160 = smul.addr %s159, 8
        %s161 = scalar_lea.vmem %s1, %s160
        %v162 = vld [vmem:[%s156] sm:$0xff]
        %v163 = vld [vmem:[%s161] sm:$0xff]
        %v164 = vld [vmem:[%s161 + $0x8] sm:$0xff]
        %v165 = vld [vmem:[%s161 + $0x10] sm:$0xff]
        %v166 = vld [vmem:[%s161 + $0x18] sm:$0xff]
        %vm167 = vcmask 261120
        %v169 = vsel %vm167, %v162, 0
        %171 = vmatprep.subr.mxu0 0.0
        %172 = vmatpush1.msra.mxu0 %v163
        %173 = vmatprep.subr.mxu0 0.0
        %174 = vmatpush1.msra.mxu0 %v164
        %175 = vmatprep.subr.mxu0 0.0
        %176 = vmatpush1.msra.mxu0 %v165
        %177 = vmatprep.subr.mxu0 0.0
        %178 = vmatpush1.msra.mxu0 %v166
        %179 = vmatprep.subr.mxu0 0.0
        %180 = vmatpush1.msra.mxu0 0.0
        %181 = vmatprep.subr.mxu0 0.0
        %182 = vmatpush1.msra.mxu0 0.0
        %183 = vmatprep.subr.mxu0 0.0
        %184 = vmatpush1.msra.mxu0 0.0
        %185 = vmatprep.subr.mxu0 0.0
        %186 = vmatpush1.msra.mxu0 0.0
        %187 = vmatprep.subr.mxu0 0.0
        %188 = vmatpush1.msra.mxu0 0.0
        %189 = vmatprep.subr.mxu0 0.0
        %190 = vmatpush1.msra.mxu0 0.0
        %191 = vmatprep.subr.mxu0 0.0
        %192 = vmatpush1.msra.mxu0 0.0
        %193 = vmatprep.subr.mxu0 0.0
        %194 = vmatpush1.msra.mxu0 0.0
        %195 = vmatprep.subr.mxu0 0.0
        %196 = vmatpush1.msra.mxu0 0.0
        %197 = vmatprep.subr.mxu0 0.0
        %198 = vmatpush1.msra.mxu0 0.0
        %199 = vmatprep.subr.mxu0 0.0
        %200 = vmatpush1.msra.mxu0 0.0
        %201 = vmatprep.subr.mxu0 0.0
        %202 = vmatpush1.msra.mxu0 0.0
        %203 = vmatprep.subr.mxu0 0.0
        %204 = vmatpush1.msra.mxu0 0.0
        %205 = vmatprep.subr.mxu0 0.0
        %206 = vmatpush1.msra.mxu0 0.0
        %207 = vmatprep.subr.mxu0 0.0
        %208 = vmatpush1.msra.mxu0 0.0
        %209 = vmatprep.subr.mxu0 0.0
        %210 = vmatpush1.msra.mxu0 0.0
        %211 = vmatprep.subr.mxu0 0.0
        %212 = vmatpush1.msra.mxu0 0.0
        %213 = vmatprep.subr.mxu0 0.0
        %214 = vmatpush1.msra.mxu0 0.0
        %215 = vmatprep.subr.mxu0 0.0
        %216 = vmatpush1.msra.mxu0 0.0
        %217 = vmatprep.subr.mxu0 0.0
        %218 = vmatpush1.msra.mxu0 0.0
        %219 = vmatprep.subr.mxu0 0.0
        %220 = vmatpush1.msra.mxu0 0.0
        %221 = vmatprep.subr.mxu0 0.0
        %222 = vmatpush1.msra.mxu0 0.0
        %223 = vmatprep.subr.mxu0 0.0
        %224 = vmatpush1.msra.mxu0 0.0
        %225 = vmatprep.subr.mxu0 0.0
        %226 = vmatpush1.msra.mxu0 0.0
        %227 = vmatprep.subr.mxu0 0.0
        %228 = vmatpush1.msra.mxu0 0.0
        %229 = vmatprep.subr.mxu0 0.0
        %230 = vmatpush1.msra.mxu0 0.0
        %231 = vmatprep.subr.mxu0 0.0
        %232 = vmatpush1.msra.mxu0 0.0
        %233 = vmatprep.subr.mxu0 0.0
        %234 = vmatpush1.msra.mxu0 0.0
        %235 = vmatprep.mubr.f32.mxu0 0.0
        %236 = vmatmul.mubr.f32.gmra.mrb[0].mxu0 %v169
        %v237 = vpop.f32.mrb[0].mxu0
        %v238 = vadd.f32 0.0, %v237
        %v239 = vpop.f32.mrb[0].mxu0
        %240 = vdwg.mxu0
        %vm241 = vcmask 64512
        %242 = vst.msk [vmem:[%s151] sm:$0xff] %vm241, %v238
        %s243 = scalar_lea.vmem %s156, 8
        %v244 = vld [vmem:[%s243] sm:$0xff]
        %s245 = scalar_lea.vmem %s161, 32
        %v246 = vld [vmem:[%s245] sm:$0xff]
        %v247 = vld [vmem:[%s245 + $0x8] sm:$0xff]
        %v248 = vld [vmem:[%s245 + $0x10] sm:$0xff]
        %v249 = vld [vmem:[%s245 + $0x18] sm:$0xff]
        %v251 = vsel %vm167, %v244, 0
        %253 = vmatprep.subr.mxu0 0.0
        %254 = vmatpush1.msra.mxu0 %v246
        %255 = vmatprep.subr.mxu0 0.0
        %256 = vmatpush1.msra.mxu0 %v247
        %257 = vmatprep.subr.mxu0 0.0
        %258 = vmatpush1.msra.mxu0 %v248
        %259 = vmatprep.subr.mxu0 0.0
        %260 = vmatpush1.msra.mxu0 %v249
        %261 = vmatprep.subr.mxu0 0.0
        %262 = vmatpush1.msra.mxu0 0.0
        %263 = vmatprep.subr.mxu0 0.0
        %264 = vmatpush1.msra.mxu0 0.0
        %265 = vmatprep.subr.mxu0 0.0
        %266 = vmatpush1.msra.mxu0 0.0
        %267 = vmatprep.subr.mxu0 0.0
        %268 = vmatpush1.msra.mxu0 0.0
        %269 = vmatprep.subr.mxu0 0.0
        %270 = vmatpush1.msra.mxu0 0.0
        %271 = vmatprep.subr.mxu0 0.0
        %272 = vmatpush1.msra.mxu0 0.0
        %273 = vmatprep.subr.mxu0 0.0
        %274 = vmatpush1.msra.mxu0 0.0
        %275 = vmatprep.subr.mxu0 0.0
        %276 = vmatpush1.msra.mxu0 0.0
        %277 = vmatprep.subr.mxu0 0.0
        %278 = vmatpush1.msra.mxu0 0.0
        %279 = vmatprep.subr.mxu0 0.0
        %280 = vmatpush1.msra.mxu0 0.0
        %281 = vmatprep.subr.mxu0 0.0
        %282 = vmatpush1.msra.mxu0 0.0
        %283 = vmatprep.subr.mxu0 0.0
        %284 = vmatpush1.msra.mxu0 0.0
        %285 = vmatprep.subr.mxu0 0.0
        %286 = vmatpush1.msra.mxu0 0.0
        %287 = vmatprep.subr.mxu0 0.0
        %288 = vmatpush1.msra.mxu0 0.0
        %289 = vmatprep.subr.mxu0 0.0
        %290 = vmatpush1.msra.mxu0 0.0
        %291 = vmatprep.subr.mxu0 0.0
        %292 = vmatpush1.msra.mxu0 0.0
        %293 = vmatprep.subr.mxu0 0.0
        %294 = vmatpush1.msra.mxu0 0.0
        %295 = vmatprep.subr.mxu0 0.0
        %296 = vmatpush1.msra.mxu0 0.0
        %297 = vmatprep.subr.mxu0 0.0
        %298 = vmatpush1.msra.mxu0 0.0
        %299 = vmatprep.subr.mxu0 0.0
        %300 = vmatpush1.msra.mxu0 0.0
        %301 = vmatprep.subr.mxu0 0.0
        %302 = vmatpush1.msra.mxu0 0.0
        %303 = vmatprep.subr.mxu0 0.0
        %304 = vmatpush1.msra.mxu0 0.0
        %305 = vmatprep.subr.mxu0 0.0
        %306 = vmatpush1.msra.mxu0 0.0
        %307 = vmatprep.subr.mxu0 0.0
        %308 = vmatpush1.msra.mxu0 0.0
        %309 = vmatprep.subr.mxu0 0.0
        %310 = vmatpush1.msra.mxu0 0.0
        %311 = vmatprep.subr.mxu0 0.0
        %312 = vmatpush1.msra.mxu0 0.0
        %313 = vmatprep.subr.mxu0 0.0
        %314 = vmatpush1.msra.mxu0 0.0
        %315 = vmatprep.subr.mxu0 0.0
        %316 = vmatpush1.msra.mxu0 0.0
        %317 = vmatprep.mubr.f32.mxu0 0.0
        %318 = vmatmul.mubr.f32.gmra.mrb[0].mxu0 %v251
        %v319 = vpop.f32.mrb[0].mxu0
        %v320 = vadd.f32 0.0, %v319
        %v321 = vpop.f32.mrb[0].mxu0
        %322 = vdwg.mxu0
        %s323 = scalar_lea.vmem %s151, 8 [#allocation2]
        %324 = vst.msk [vmem:[%s323] sm:$0xff] %vm241, %v320
        %s325 = scalar_lea.vmem %s156, 16
        %v326 = vld [vmem:[%s325] sm:$0xff]
        %s327 = scalar_lea.vmem %s161, 64
        %v328 = vld [vmem:[%s327] sm:$0xff]
        %v329 = vld [vmem:[%s327 + $0x8] sm:$0xff]
        %v330 = vld [vmem:[%s327 + $0x10] sm:$0xff]
        %v331 = vld [vmem:[%s327 + $0x18] sm:$0xff]
        %v333 = vsel %vm167, %v326, 0
        %335 = vmatprep.subr.mxu0 0.0
        %336 = vmatpush1.msra.mxu0 %v328
        %337 = vmatprep.subr.mxu0 0.0
        %338 = vmatpush1.msra.mxu0 %v329
        %339 = vmatprep.subr.mxu0 0.0
        %340 = vmatpush1.msra.mxu0 %v330
        %341 = vmatprep.subr.mxu0 0.0
        %342 = vmatpush1.msra.mxu0 %v331
        %343 = vmatprep.subr.mxu0 0.0
        %344 = vmatpush1.msra.mxu0 0.0
        %345 = vmatprep.subr.mxu0 0.0
        %346 = vmatpush1.msra.mxu0 0.0
        %347 = vmatprep.subr.mxu0 0.0
        %348 = vmatpush1.msra.mxu0 0.0
        %349 = vmatprep.subr.mxu0 0.0
        %350 = vmatpush1.msra.mxu0 0.0
        %351 = vmatprep.subr.mxu0 0.0
        %352 = vmatpush1.msra.mxu0 0.0
        %353 = vmatprep.subr.mxu0 0.0
        %354 = vmatpush1.msra.mxu0 0.0
        %355 = vmatprep.subr.mxu0 0.0
        %356 = vmatpush1.msra.mxu0 0.0
        %357 = vmatprep.subr.mxu0 0.0
        %358 = vmatpush1.msra.mxu0 0.0
        %359 = vmatprep.subr.mxu0 0.0
        %360 = vmatpush1.msra.mxu0 0.0
        %361 = vmatprep.subr.mxu0 0.0
        %362 = vmatpush1.msra.mxu0 0.0
        %363 = vmatprep.subr.mxu0 0.0
        %364 = vmatpush1.msra.mxu0 0.0
        %365 = vmatprep.subr.mxu0 0.0
        %366 = vmatpush1.msra.mxu0 0.0
        %367 = vmatprep.subr.mxu0 0.0
        %368 = vmatpush1.msra.mxu0 0.0
        %369 = vmatprep.subr.mxu0 0.0
        %370 = vmatpush1.msra.mxu0 0.0
        %371 = vmatprep.subr.mxu0 0.0
        %372 = vmatpush1.msra.mxu0 0.0
        %373 = vmatprep.subr.mxu0 0.0
        %374 = vmatpush1.msra.mxu0 0.0
        %375 = vmatprep.subr.mxu0 0.0
        %376 = vmatpush1.msra.mxu0 0.0
        %377 = vmatprep.subr.mxu0 0.0
        %378 = vmatpush1.msra.mxu0 0.0
        %379 = vmatprep.subr.mxu0 0.0
        %380 = vmatpush1.msra.mxu0 0.0
        %381 = vmatprep.subr.mxu0 0.0
        %382 = vmatpush1.msra.mxu0 0.0
        %383 = vmatprep.subr.mxu0 0.0
        %384 = vmatpush1.msra.mxu0 0.0
        %385 = vmatprep.subr.mxu0 0.0
        %386 = vmatpush1.msra.mxu0 0.0
        %387 = vmatprep.subr.mxu0 0.0
        %388 = vmatpush1.msra.mxu0 0.0
        %389 = vmatprep.subr.mxu0 0.0
        %390 = vmatpush1.msra.mxu0 0.0
        %391 = vmatprep.subr.mxu0 0.0
        %392 = vmatpush1.msra.mxu0 0.0
        %393 = vmatprep.subr.mxu0 0.0
        %394 = vmatpush1.msra.mxu0 0.0
        %395 = vmatprep.subr.mxu0 0.0
        %396 = vmatpush1.msra.mxu0 0.0
        %397 = vmatprep.subr.mxu0 0.0
        %398 = vmatpush1.msra.mxu0 0.0
        %399 = vmatprep.mubr.f32.mxu0 0.0
        %400 = vmatmul.mubr.f32.gmra.mrb[0].mxu0 %v333
        %v401 = vpop.f32.mrb[0].mxu0
        %v402 = vadd.f32 0.0, %v401
        %v403 = vpop.f32.mrb[0].mxu0
        %404 = vdwg.mxu0
        %s405 = scalar_lea.vmem %s151, 16 [#allocation2]
        %406 = vst.msk [vmem:[%s405] sm:$0xff] %vm241, %v402
        %s407 = scalar_lea.vmem %s156, 24
        %v408 = vld [vmem:[%s407] sm:$0xff]
        %s409 = scalar_lea.vmem %s161, 96
        %v410 = vld [vmem:[%s409] sm:$0xff]
        %v411 = vld [vmem:[%s409 + $0x8] sm:$0xff]
        %v412 = vld [vmem:[%s409 + $0x10] sm:$0xff]
        %v413 = vld [vmem:[%s409 + $0x18] sm:$0xff]
        %v415 = vsel %vm167, %v408, 0
        %417 = vmatprep.subr.mxu0 0.0
        %418 = vmatpush1.msra.mxu0 %v410
        %419 = vmatprep.subr.mxu0 0.0
        %420 = vmatpush1.msra.mxu0 %v411
        %421 = vmatprep.subr.mxu0 0.0
        %422 = vmatpush1.msra.mxu0 %v412
        %423 = vmatprep.subr.mxu0 0.0
        %424 = vmatpush1.msra.mxu0 %v413
        %425 = vmatprep.subr.mxu0 0.0
        %426 = vmatpush1.msra.mxu0 0.0
        %427 = vmatprep.subr.mxu0 0.0
        %428 = vmatpush1.msra.mxu0 0.0
        %429 = vmatprep.subr.mxu0 0.0
        %430 = vmatpush1.msra.mxu0 0.0
        %431 = vmatprep.subr.mxu0 0.0
        %432 = vmatpush1.msra.mxu0 0.0
        %433 = vmatprep.subr.mxu0 0.0
        %434 = vmatpush1.msra.mxu0 0.0
        %435 = vmatprep.subr.mxu0 0.0
        %436 = vmatpush1.msra.mxu0 0.0
        %437 = vmatprep.subr.mxu0 0.0
        %438 = vmatpush1.msra.mxu0 0.0
        %439 = vmatprep.subr.mxu0 0.0
        %440 = vmatpush1.msra.mxu0 0.0
        %441 = vmatprep.subr.mxu0 0.0
        %442 = vmatpush1.msra.mxu0 0.0
        %443 = vmatprep.subr.mxu0 0.0
        %444 = vmatpush1.msra.mxu0 0.0
        %445 = vmatprep.subr.mxu0 0.0
        %446 = vmatpush1.msra.mxu0 0.0
        %447 = vmatprep.subr.mxu0 0.0
        %448 = vmatpush1.msra.mxu0 0.0
        %449 = vmatprep.subr.mxu0 0.0
        %450 = vmatpush1.msra.mxu0 0.0
        %451 = vmatprep.subr.mxu0 0.0
        %452 = vmatpush1.msra.mxu0 0.0
        %453 = vmatprep.subr.mxu0 0.0
        %454 = vmatpush1.msra.mxu0 0.0
        %455 = vmatprep.subr.mxu0 0.0
        %456 = vmatpush1.msra.mxu0 0.0
        %457 = vmatprep.subr.mxu0 0.0
        %458 = vmatpush1.msra.mxu0 0.0
        %459 = vmatprep.subr.mxu0 0.0
        %460 = vmatpush1.msra.mxu0 0.0
        %461 = vmatprep.subr.mxu0 0.0
        %462 = vmatpush1.msra.mxu0 0.0
        %463 = vmatprep.subr.mxu0 0.0
        %464 = vmatpush1.msra.mxu0 0.0
        %465 = vmatprep.subr.mxu0 0.0
        %466 = vmatpush1.msra.mxu0 0.0
        %467 = vmatprep.subr.mxu0 0.0
        %468 = vmatpush1.msra.mxu0 0.0
        %469 = vmatprep.subr.mxu0 0.0
        %470 = vmatpush1.msra.mxu0 0.0
        %471 = vmatprep.subr.mxu0 0.0
        %472 = vmatpush1.msra.mxu0 0.0
        %473 = vmatprep.subr.mxu0 0.0
        %474 = vmatpush1.msra.mxu0 0.0
        %475 = vmatprep.subr.mxu0 0.0
        %476 = vmatpush1.msra.mxu0 0.0
        %477 = vmatprep.subr.mxu0 0.0
        %478 = vmatpush1.msra.mxu0 0.0
        %479 = vmatprep.subr.mxu0 0.0
        %480 = vmatpush1.msra.mxu0 0.0
        %481 = vmatprep.mubr.f32.mxu0 0.0
        %482 = vmatmul.mubr.f32.gmra.mrb[0].mxu0 %v415
        %v483 = vpop.f32.mrb[0].mxu0
        %v484 = vadd.f32 0.0, %v483
        %v485 = vpop.f32.mrb[0].mxu0
        %486 = vdwg.mxu0
        %s487 = scalar_lea.vmem %s151, 24 [#allocation2]
        %488 = vst.msk [vmem:[%s487] sm:$0xff] %vm241, %v484
        %s489 = sand.u32 %s76, 1
        %s490 = scalar_lea.sflag [#allocation3], %s489
        %s491 = sand.u32 %s76, 1
        %s492 = smul.addr %s491, 32
        %s493 = scalar_lea.vmem [#allocation2], %s492
        // Predicated region
        $region29: #{tpu_custom_call.1} parent=27 // pred_check
          %p494 = pneg %p86
        $region30: #{tpu_custom_call.1} parent=27 // pred_check_branch
          %496 = sbr.rel (%p494) target = $region32
        $region31: #{tpu_custom_call.1} parent=27 // pred_region
          %s498 = ssub.s32 512, 512
          %499 = vsyncadd %s490, %s498
          %s500 = smul.addr %s16, 4
          %s501 = smul.addr %s500, 128
          %s502 = scalar_lea.hbm %s2, %s501
          %s503 = sshll.u32 %s493, 4
          %s504 = int_to_ptr.vmem [resolvable:$true] %s503
          %509 = dma.vmem_to_hbm [thread:$0]  %s504, 512, %s502, %s490, 128, 128, 8
        $region32: #{tpu_custom_call.1} parent=27 // pred_fallthru
          _
      $region28: #{tpu_custom_call.1} parent=5 // pred_fallthru
        _
      %p510 = scmp.le.s32.totalorder 2, %s11
      // Predicated region
      $region33: #{tpu_custom_call.1} parent=5 // pred_check
        %p511 = pneg %p510
      $region34: #{tpu_custom_call.1} parent=5 // pred_check_branch
        %513 = sbr.rel (%p511) target = $region36
      $region35: #{tpu_custom_call.1} parent=5 // pred_region
        %s514 = ssub.s32 %s11, 2
        // Predicated region
        $region37: #{tpu_custom_call.1} parent=35 // pred_check
          %p515 = pneg %p92
        $region38: #{tpu_custom_call.1} parent=35 // pred_check_branch
          %517 = sbr.rel (%p515) target = $region40
        $region39: #{tpu_custom_call.1} parent=35 // pred_region
          %s518 = sand.u32 %s77, 1
          %s519 = scalar_lea.sflag [#allocation3], %s518
          %s520 = sand.u32 %s77, 1
          %s521 = smul.addr %s520, 32
          %s522 = scalar_lea.vmem [#allocation2], %s521
          %523 = dma.done %s519, 512
        $region40: #{tpu_custom_call.1} parent=35 // pred_fallthru
          _
      $region36: #{tpu_custom_call.1} parent=5 // pred_fallthru
        _
    $region6: #{tpu_custom_call.1} parent=1 // loop_footer
      %s15 = sadd.s32 1, %s11
    $region7: #{tpu_custom_call.1} parent=1 // loop_footer_branch
      %10 = sbr.rel target = $region3
    $region8: #{tpu_custom_call.1} parent=1 // loop_exit
      _
    %524 = vsyncpa [#allocation3], 1
    %s525 = scalar_lea.sflag [#allocation3], 1
    %526 = vsyncpa %s525, 1

</llo_original>
